<compile_context>
chip_gen: v7x
topology: tpu7x:2x2x1
jax: 0.10.0
libtpu: 0.0.40
codegen_flags: <defaults>
</compile_context>

<pallas_src>
import functools

import jax
import jax.numpy as jnp
from jax.experimental import pallas as pl
from jax.experimental.pallas import tpu as pltpu


def _grad_sums_kernel(x_ref, mask_w_ref, mask_h_ref, out_ref, *, W, H, D):
    # x_ref:      (Gb, D, HW) input block (any float dtype)
    # mask_*_ref: (1, 1, HW)  f32 0/1 masks (resident across grid steps)
    # out_ref:    (1, 1, 128) f32 per-block partial sums (lanes 0..2 used)
    x = x_ref[...].astype(jnp.float32)          # (Gb, D, HW)
    hw = x.shape[-1]

    mask_w = mask_w_ref[...]                    # 1.0 where (p % W)  >= 1
    mask_h = mask_h_ref[...]                    # 1.0 where (p // W) >= 1

    # W-direction diff (PyTorch dim 4): neighbour is 1 lane away.
    #   roll(x, 1)[p] = x[p-1]  ->  |x[h,w] - x[h,w-1]| valid for w >= 1.
    xr_w = pltpu.roll(x, shift=1 % hw, axis=2)
    dz_sum = jnp.sum(jnp.abs(x - xr_w) * mask_w)

    # H-direction diff (PyTorch dim 3): neighbour is W lanes away.
    #   roll(x, W)[p] = x[p-W]  ->  |x[h,w] - x[h-1,w]| valid for h >= 1.
    xr_h = pltpu.roll(x, shift=W % hw, axis=2)
    dx_sum = jnp.sum(jnp.abs(x - xr_h) * mask_h)

    # D-direction diff (PyTorch dim 2): shift along the sublane axis.
    if D > 1:
        dy_sum = jnp.sum(jnp.abs(x[:, 1:, :] - x[:, :-1, :]))
    else:
        dy_sum = jnp.float32(0.0)

    lane = jax.lax.broadcasted_iota(jnp.int32, (1, 1, 128), 2)
    row = jnp.where(lane == 0, dx_sum, 0.0)
    row = row + jnp.where(lane == 1, dy_sum, 0.0)
    row = row + jnp.where(lane == 2, dz_sum, 0.0)
    out_ref[...] = row.astype(jnp.float32)


def grad_loss(y_pred: jax.Array, penalty: str = "l1",
              *, target_block_bytes: int = 4 * 1024 * 1024) -> jax.Array:
    """Forward pass of Grad: scalar L1 gradient penalty on a 5-D field."""
    if penalty != "l1":
        # mirrors the (buggy) PyTorch check, which only ever accepts 'l1'
        raise ValueError("Penalty must either be l1 or l2")

    N, C, D, H, W = y_pred.shape
    G = N * C
    HW = H * W
    x = y_pred.reshape(G, D, HW)

    itemsize = jnp.dtype(y_pred.dtype).itemsize
    vol_bytes = D * HW * itemsize

    # Batch volumes per grid step up to ~target_block_bytes per buffer.
    gb = int(max(1, min(G, target_block_bytes // max(vol_bytes, 1))))
    num_blocks = -(-G // gb)                    # ceil div
    g_pad = num_blocks * gb
    if g_pad != G:
        # zero-padded volumes contribute exactly 0 to every |diff| sum
        x = jnp.pad(x, ((0, g_pad - G), (0, 0), (0, 0)))

    # Precompute 0/1 validity masks for the flattened (H*W) lane axis.
    lane_idx = jnp.arange(HW, dtype=jnp.int32)
    mask_w = ((lane_idx % W) >= 1).astype(jnp.float32).reshape(1, 1, HW)
    mask_h = ((lane_idx // W) >= 1).astype(jnp.float32).reshape(1, 1, HW)

    block_bytes = gb * D * HW * itemsize
    vmem_limit = int(min(max(2 * block_bytes + 8 * HW + (2 << 20),
                             32 * 1024 * 1024),
                         100 * 1024 * 1024))
    # TODO(synk): volumes whose double-buffered block exceeds ~28 MiB need a
    # D-tiled grid axis with a 1-row halo to fit v7x's 64 MiB VMEM.

    total_elems = G * D * HW
    cost = pl.CostEstimate(
        flops=9 * total_elems,
        transcendentals=0,
        bytes_accessed=g_pad * D * HW * itemsize + 8 * HW + num_blocks * 512,
    )

    kernel = functools.partial(_grad_sums_kernel, W=W, H=H, D=D)

    partials = pl.pallas_call(
        kernel,
        out_shape=jax.ShapeDtypeStruct((num_blocks, 1, 128), jnp.float32),
        grid_spec=pltpu.PrefetchScalarGridSpec(
            num_scalar_prefetch=0,
            grid=(num_blocks,),
            in_specs=[
                pl.BlockSpec((gb, D, HW), lambda g: (g, 0, 0)),
                pl.BlockSpec((1, 1, HW), lambda g: (0, 0, 0)),
                pl.BlockSpec((1, 1, HW), lambda g: (0, 0, 0)),
            ],
            out_specs=pl.BlockSpec((1, 1, 128), lambda g: (g, 0, 0)),
        ),
        compiler_params=pltpu.CompilerParams(
            dimension_semantics=("parallel",),
            vmem_limit_bytes=vmem_limit,
        ),
        cost_estimate=cost,
    )(x, mask_w, mask_h)

    totals = jnp.sum(partials, axis=(0, 1))     # (128,) ; lanes 0..2 used
    dx_sum, dy_sum, dz_sum = totals[0], totals[1], totals[2]

    n_dx = G * D * (H - 1) * W                  # H-direction pair count
    n_dy = G * (D - 1) * H * W                  # D-direction pair count
    n_dz = G * D * H * (W - 1)                  # W-direction pair count

    d = dx_sum / n_dx + dy_sum / n_dy + dz_sum / n_dz
    return d / 3.0


def _grad_loss_ref(y_pred):
    x = y_pred.astype(jnp.float32)
    dy = jnp.abs(x[:, :, 1:, :, :] - x[:, :, :-1, :, :])
    dx = jnp.abs(x[:, :, :, 1:, :] - x[:, :, :, :-1, :])
    dz = jnp.abs(x[:, :, :, :, 1:] - x[:, :, :, :, :-1])
    return (jnp.mean(dx) + jnp.mean(dy) + jnp.mean(dz)) / 3.0


if __name__ == "__main__":
    key = jax.random.PRNGKey(0)
    # small 5-D displacement-field-like input: (N, C, D, H, W)
    y_pred = jax.random.normal(key, (2, 4, 8, 16, 16), dtype=jnp.float32)

    out = grad_loss(y_pred)
    out = jax.block_until_ready(out)

    ref = _grad_loss_ref(y_pred)
    assert jnp.allclose(out, ref, rtol=1e-5, atol=1e-5), (out, ref)

    print("KERNEL_OK")
</pallas_src>

<mosaic_0001>
module attributes {stable_mosaic.version = 11 : i64} {
  func.func @_grad_sums_kernel(%arg0: i32, %arg1: memref<8x8x256xf32, #tpu.memory_space<vmem>>, %arg2: memref<1x1x256xf32, #tpu.memory_space<vmem>>, %arg3: memref<1x1x256xf32, #tpu.memory_space<vmem>>, %arg4: memref<1x1x128xf32, #tpu.memory_space<vmem>>) attributes {dimension_semantics = [#tpu.dimension_semantics<parallel>], iteration_bounds = array<i64: 1>, scalar_prefetch = 0 : i64, scratch_operands = 0 : i64, tpu.core_type = #tpu.core_type<tc>, window_params = [{transform_indices = @transform_0, window_bounds = array<i64: 8, 8, 256>}, {pipeline_mode = #tpu.pipeline_mode<synchronous>, transform_indices = @transform_1, window_bounds = array<i64: 1, 1, 256>}, {pipeline_mode = #tpu.pipeline_mode<synchronous>, transform_indices = @transform_2, window_bounds = array<i64: 1, 1, 256>}, {transform_indices = @transform_3, window_bounds = array<i64: 1, 1, 128>}]} {
    %c0 = arith.constant 0 : index
    %c0_0 = arith.constant 0 : index
    %c0_1 = arith.constant 0 : index
    %0 = vector.load %arg1[%c0, %c0_0, %c0_1] : memref<8x8x256xf32, #tpu.memory_space<vmem>>, vector<8x8x256xf32>
    %c0_2 = arith.constant 0 : index
    %c0_3 = arith.constant 0 : index
    %c0_4 = arith.constant 0 : index
    %1 = vector.load %arg2[%c0_2, %c0_3, %c0_4] : memref<1x1x256xf32, #tpu.memory_space<vmem>>, vector<1x1x256xf32>
    %c0_5 = arith.constant 0 : index
    %c0_6 = arith.constant 0 : index
    %c0_7 = arith.constant 0 : index
    %2 = vector.load %arg3[%c0_5, %c0_6, %c0_7] : memref<1x1x256xf32, #tpu.memory_space<vmem>>, vector<1x1x256xf32>
    %c1_i32 = arith.constant 1 : i32
    %3 = tpu.dynamic_rotate %0 by %c1_i32 dim 2 : vector<8x8x256xf32>, i32 -> vector<8x8x256xf32>
    %4 = arith.subf %0, %3 : vector<8x8x256xf32>
    %5 = math.absf %4 : vector<8x8x256xf32>
    %6 = vector.broadcast %1 : vector<1x1x256xf32> to vector<8x8x256xf32>
    %7 = arith.mulf %5, %6 : vector<8x8x256xf32>
    %8 = vector.shape_cast %7 : vector<8x8x256xf32> to vector<1x8x8x256xf32>
    %cst = arith.constant dense<0.000000e+00> : vector<1xf32>
    %9 = vector.multi_reduction <add>, %8, %cst [1, 2, 3] : vector<1x8x8x256xf32> to vector<1xf32>
    %10 = vector.shape_cast %9 : vector<1xf32> to vector<1x1x1x1xf32>
    %11 = vector.extract %10[0, 0, 0, 0] : f32 from vector<1x1x1x1xf32>
    %c16_i32 = arith.constant 16 : i32
    %12 = tpu.dynamic_rotate %0 by %c16_i32 dim 2 : vector<8x8x256xf32>, i32 -> vector<8x8x256xf32>
    %13 = arith.subf %0, %12 : vector<8x8x256xf32>
    %14 = math.absf %13 : vector<8x8x256xf32>
    %15 = vector.broadcast %2 : vector<1x1x256xf32> to vector<8x8x256xf32>
    %16 = arith.mulf %14, %15 : vector<8x8x256xf32>
    %17 = vector.shape_cast %16 : vector<8x8x256xf32> to vector<1x8x8x256xf32>
    %cst_8 = arith.constant dense<0.000000e+00> : vector<1xf32>
    %18 = vector.multi_reduction <add>, %17, %cst_8 [1, 2, 3] : vector<1x8x8x256xf32> to vector<1xf32>
    %19 = vector.shape_cast %18 : vector<1xf32> to vector<1x1x1x1xf32>
    %20 = vector.extract %19[0, 0, 0, 0] : f32 from vector<1x1x1x1xf32>
    %21 = vector.extract_strided_slice %0 {offsets = [0, 1, 0], sizes = [8, 7, 256], strides = [1, 1, 1]} : vector<8x8x256xf32> to vector<8x7x256xf32>
    %22 = vector.extract_strided_slice %0 {offsets = [0, 0, 0], sizes = [8, 7, 256], strides = [1, 1, 1]} : vector<8x8x256xf32> to vector<8x7x256xf32>
    %23 = arith.subf %21, %22 : vector<8x7x256xf32>
    %24 = math.absf %23 : vector<8x7x256xf32>
    %25 = vector.shape_cast %24 : vector<8x7x256xf32> to vector<1x8x7x256xf32>
    %cst_9 = arith.constant dense<0.000000e+00> : vector<1xf32>
    %26 = vector.multi_reduction <add>, %25, %cst_9 [1, 2, 3] : vector<1x8x7x256xf32> to vector<1xf32>
    %27 = vector.shape_cast %26 : vector<1xf32> to vector<1x1x1x1xf32>
    %28 = vector.extract %27[0, 0, 0, 0] : f32 from vector<1x1x1x1xf32>
    %29 = tpu.iota {dimensions = array<i32: 2>} : vector<1x1x128xi32>
    %c0_i32 = arith.constant 0 : i32
    %30 = vector.broadcast %c0_i32 : i32 to vector<1x1x128xi32>
    %31 = arith.cmpi eq, %29, %30 : vector<1x1x128xi32>
    %cst_10 = arith.constant 0.000000e+00 : f32
    %32 = vector.broadcast %20 : f32 to vector<1x1x128xf32>
    %33 = vector.broadcast %cst_10 : f32 to vector<1x1x128xf32>
    %34 = arith.select %31, %32, %33 : vector<1x1x128xi1>, vector<1x1x128xf32>
    %c1_i32_11 = arith.constant 1 : i32
    %35 = vector.broadcast %c1_i32_11 : i32 to vector<1x1x128xi32>
    %36 = arith.cmpi eq, %29, %35 : vector<1x1x128xi32>
    %cst_12 = arith.constant 0.000000e+00 : f32
    %37 = vector.broadcast %28 : f32 to vector<1x1x128xf32>
    %38 = vector.broadcast %cst_12 : f32 to vector<1x1x128xf32>
    %39 = arith.select %36, %37, %38 : vector<1x1x128xi1>, vector<1x1x128xf32>
    %40 = arith.addf %34, %39 : vector<1x1x128xf32>
    %c2_i32 = arith.constant 2 : i32
    %41 = vector.broadcast %c2_i32 : i32 to vector<1x1x128xi32>
    %42 = arith.cmpi eq, %29, %41 : vector<1x1x128xi32>
    %cst_13 = arith.constant 0.000000e+00 : f32
    %43 = vector.broadcast %11 : f32 to vector<1x1x128xf32>
    %44 = vector.broadcast %cst_13 : f32 to vector<1x1x128xf32>
    %45 = arith.select %42, %43, %44 : vector<1x1x128xi1>, vector<1x1x128xf32>
    %46 = arith.addf %40, %45 : vector<1x1x128xf32>
    %c0_14 = arith.constant 0 : index
    %c0_15 = arith.constant 0 : index
    %c0_16 = arith.constant 0 : index
    %47 = vector.load %arg4[%c0_14, %c0_15, %c0_16] : memref<1x1x128xf32, #tpu.memory_space<vmem>>, vector<1x1x128xf32>
    tpu.vector_store %arg4[%c0_14, %c0_15, %c0_16], %46 {strides = array<i32>} : memref<1x1x128xf32, #tpu.memory_space<vmem>>, vector<1x1x128xf32>,
    return
  }
  func.func @transform_0(%arg0: i32) -> (i32, i32, i32) {
    %c0_i32 = arith.constant 0 : i32
    %c0_i32_0 = arith.constant 0 : i32
    %c0_i32_1 = arith.constant 0 : i32
    return %arg0, %c0_i32, %c0_i32_0 : i32, i32, i32
  }
  func.func @transform_1(%arg0: i32) -> (i32, i32, i32) {
    %c0_i32 = arith.constant 0 : i32
    %c0_i32_0 = arith.constant 0 : i32
    %c0_i32_1 = arith.constant 0 : i32
    %c0_i32_2 = arith.constant 0 : i32
    return %c0_i32, %c0_i32_0, %c0_i32_1 : i32, i32, i32
  }
  func.func @transform_2(%arg0: i32) -> (i32, i32, i32) {
    %c0_i32 = arith.constant 0 : i32
    %c0_i32_0 = arith.constant 0 : i32
    %c0_i32_1 = arith.constant 0 : i32
    %c0_i32_2 = arith.constant 0 : i32
    return %c0_i32, %c0_i32_0, %c0_i32_1 : i32, i32, i32
  }
  func.func @transform_3(%arg0: i32) -> (i32, i32, i32) {
    %c0_i32 = arith.constant 0 : i32
    %c0_i32_0 = arith.constant 0 : i32
    %c0_i32_1 = arith.constant 0 : i32
    return %arg0, %c0_i32, %c0_i32_0 : i32, i32, i32
  }
}

</mosaic_0001>

<llo_original>
// kernel: tpu_custom_call.1
$region0: #{tpu_custom_call.1}
  #allocation0 [shape = 'u32[]', space=smem, size = 0x4, offset = 0x4, fixed_abs, tag = 'smem constant byte address 0x4 - core index']
  #allocation1 [shape = 'u32[144,128]{1,0:T(1,128)}', space=vmem, size = 0x12000, scoped, tag = 'internal scratch']
  %s0 = inlined_call_operand.hbm [shape: f32[8,8,256], index: 0, kind: input, shape index: {}]
  %s1 = inlined_call_operand.vmem [shape: f32[1,1,256], index: 1, kind: input, shape index: {}]
  %s2 = inlined_call_operand.vmem [shape: f32[1,1,256], index: 2, kind: input, shape index: {}]
  %s3 = inlined_call_operand.hbm [shape: f32[1,1,128], index: 3, kind: output, shape index: {}]
  %s4 = sld [smem:[#allocation0]]
  $region26: #{tpu_custom_call.1} parent=0
    _
  %s6 = ssub.s32 1, %s4
  %s7 = scalar_select 0, %s6, %s4
  $region1: #{tpu_custom_call.1} parent=0
    #allocation2 [shape = 'u8[65536]{0}', space=vmem, size = 0x10000, scoped, tag = 'input window, operand 0, single buffered']
    #allocation3 [shape = 's32[1]{0}', space=sflag, size = 0x4, scoped, tag = 'scoped memory for tpu_custom_call.1']
    #allocation4 [shape = 's32[1]{0}', space=sflag, size = 0x4, scoped, tag = 'scoped memory for tpu_custom_call.1']
    #allocation5 [shape = 'u8[512]{0}', space=vmem, size = 0x400, scoped, tag = 'output window, operand 0, single buffered']
    %8 = vsyncpa [#allocation3], 0
    %9 = vsyncpa [#allocation4], 0
    // Predicated region
    $region2: #{tpu_custom_call.1} parent=1 // pred_check
      _
    $region3: #{tpu_custom_call.1} parent=1 // pred_check_branch
      %11 = sbr.rel (0) target = $region5
    $region4: #{tpu_custom_call.1} parent=1 // pred_region
      %s13 = ssub.s32 2048, 2048
      %14 = vsyncadd [#allocation3], %s13
      %s15 = sshll.u32 [#allocation2], 4
      %s16 = int_to_ptr.vmem [resolvable:$true] %s15
      %21 = dma.hbm_to_vmem [thread:$0]  %s0, 2048, %s16, [#allocation3], 256, 256, 16
    $region5: #{tpu_custom_call.1} parent=1 // pred_fallthru
      _
    // Predicated region
    $region6: #{tpu_custom_call.1} parent=1 // pred_check
      _
    $region7: #{tpu_custom_call.1} parent=1 // pred_check_branch
      %23 = sbr.rel (0) target = $region9
    $region8: #{tpu_custom_call.1} parent=1 // pred_region
      _
    $region9: #{tpu_custom_call.1} parent=1 // pred_fallthru
      _
    // Predicated region
    $region10: #{tpu_custom_call.1} parent=1 // pred_check
      _
    $region11: #{tpu_custom_call.1} parent=1 // pred_check_branch
      %25 = sbr.rel (0) target = $region13
    $region12: #{tpu_custom_call.1} parent=1 // pred_region
      _
    $region13: #{tpu_custom_call.1} parent=1 // pred_fallthru
      _
    // Predicated region
    $region14: #{tpu_custom_call.1} parent=1 // pred_check
      _
    $region15: #{tpu_custom_call.1} parent=1 // pred_check_branch
      %27 = sbr.rel (0) target = $region17
    $region16: #{tpu_custom_call.1} parent=1 // pred_region
      %28 = dma.done [#allocation3], 2048
    $region17: #{tpu_custom_call.1} parent=1 // pred_fallthru
      _
    %v29 = vld [vmem:[#allocation2] sm:$0xff]
    %v30 = vld [vmem:[#allocation2 + $0x8] sm:$0xff]
    %v31 = vld [vmem:[#allocation2 + $0x10] sm:$0xff]
    %v32 = vld [vmem:[#allocation2 + $0x18] sm:$0xff]
    %v33 = vld [vmem:[#allocation2 + $0x20] sm:$0xff]
    %v34 = vld [vmem:[#allocation2 + $0x28] sm:$0xff]
    %v35 = vld [vmem:[#allocation2 + $0x30] sm:$0xff]
    %v36 = vld [vmem:[#allocation2 + $0x38] sm:$0xff]
    %v37 = vld [vmem:[#allocation2 + $0x40] sm:$0xff]
    %v38 = vld [vmem:[#allocation2 + $0x48] sm:$0xff]
    %v39 = vld [vmem:[#allocation2 + $0x50] sm:$0xff]
    %v40 = vld [vmem:[#allocation2 + $0x58] sm:$0xff]
    %v41 = vld [vmem:[#allocation2 + $0x60] sm:$0xff]
    %v42 = vld [vmem:[#allocation2 + $0x68] sm:$0xff]
    %v43 = vld [vmem:[#allocation2 + $0x70] sm:$0xff]
    %v44 = vld [vmem:[#allocation2 + $0x78] sm:$0xff]
    %v45 = vld [vmem:[%s1] sm:$0x3]
    %v46 = vld [vmem:[%s2] sm:$0x3]
    %47 = vrot.lane.b32.xlu0 %v29, 1
    %v48 = vpop.permute.xlu0 %47
    %49 = vrot.lane.b32.xlu0 %v31, 1
    %v50 = vpop.permute.xlu0 %49
    %51 = vrot.lane.b32.xlu0 %v33, 1
    %v52 = vpop.permute.xlu0 %51
    %53 = vrot.lane.b32.xlu0 %v35, 1
    %v54 = vpop.permute.xlu0 %53
    %55 = vrot.lane.b32.xlu0 %v37, 1
    %v56 = vpop.permute.xlu0 %55
    %57 = vrot.lane.b32.xlu0 %v39, 1
    %v58 = vpop.permute.xlu0 %57
    %59 = vrot.lane.b32.xlu0 %v41, 1
    %v60 = vpop.permute.xlu0 %59
    %61 = vrot.lane.b32.xlu0 %v43, 1
    %v62 = vpop.permute.xlu0 %61
    %63 = vrot.lane.b32.xlu0 %v30, 1
    %v64 = vpop.permute.xlu0 %63
    %65 = vrot.lane.b32.xlu0 %v32, 1
    %v66 = vpop.permute.xlu0 %65
    %67 = vrot.lane.b32.xlu0 %v34, 1
    %v68 = vpop.permute.xlu0 %67
    %69 = vrot.lane.b32.xlu0 %v36, 1
    %v70 = vpop.permute.xlu0 %69
    %71 = vrot.lane.b32.xlu0 %v38, 1
    %v72 = vpop.permute.xlu0 %71
    %73 = vrot.lane.b32.xlu0 %v40, 1
    %v74 = vpop.permute.xlu0 %73
    %75 = vrot.lane.b32.xlu0 %v42, 1
    %v76 = vpop.permute.xlu0 %75
    %77 = vrot.lane.b32.xlu0 %v44, 1
    %v78 = vpop.permute.xlu0 %77
    %v79 = vlaneseq
    %v80 = vand.u32 %v79, 127
    %vm81 = vcmp.lt.s32.totalorder %v80, 1
    %v82 = vsel %vm81, %v48, %v64
    %v83 = vsel %vm81, %v50, %v66
    %v84 = vsel %vm81, %v52, %v68
    %v85 = vsel %vm81, %v54, %v70
    %v86 = vsel %vm81, %v56, %v72
    %v87 = vsel %vm81, %v58, %v74
    %v88 = vsel %vm81, %v60, %v76
    %v89 = vsel %vm81, %v62, %v78
    %v90 = vsel %vm81, %v64, %v48
    %v91 = vsel %vm81, %v66, %v50
    %v92 = vsel %vm81, %v68, %v52
    %v93 = vsel %vm81, %v70, %v54
    %v94 = vsel %vm81, %v72, %v56
    %v95 = vsel %vm81, %v74, %v58
    %v96 = vsel %vm81, %v76, %v60
    %v97 = vsel %vm81, %v78, %v62
    %v98 = vsub.f32 %v29, %v90
    %v99 = vsub.f32 %v30, %v82
    %v100 = vsub.f32 %v31, %v91
    %v101 = vsub.f32 %v32, %v83
    %v102 = vsub.f32 %v33, %v92
    %v103 = vsub.f32 %v34, %v84
    %v104 = vsub.f32 %v35, %v93
    %v105 = vsub.f32 %v36, %v85
    %v106 = vsub.f32 %v37, %v94
    %v107 = vsub.f32 %v38, %v86
    %v108 = vsub.f32 %v39, %v95
    %v109 = vsub.f32 %v40, %v87
    %v110 = vsub.f32 %v41, %v96
    %v111 = vsub.f32 %v42, %v88
    %v112 = vsub.f32 %v43, %v97
    %v113 = vsub.f32 %v44, %v89
    %v114 = vand.u32 2147483647, %v98
    %v115 = vand.u32 2147483647, %v99
    %v116 = vand.u32 2147483647, %v100
    %v117 = vand.u32 2147483647, %v101
    %v118 = vand.u32 2147483647, %v102
    %v119 = vand.u32 2147483647, %v103
    %v120 = vand.u32 2147483647, %v104
    %v121 = vand.u32 2147483647, %v105
    %v122 = vand.u32 2147483647, %v106
    %v123 = vand.u32 2147483647, %v107
    %v124 = vand.u32 2147483647, %v108
    %v125 = vand.u32 2147483647, %v109
    %v126 = vand.u32 2147483647, %v110
    %v127 = vand.u32 2147483647, %v111
    %v128 = vand.u32 2147483647, %v112
    %v129 = vand.u32 2147483647, %v113
    %v131 = vlaneseq
    %v132 = vshrl.u32 %v131, 7
    %v133 = vsub.s32 0, %v132
    %v134 = vrot.slane %v45, %v133
    %v135 = vlaneseq
    %v136 = vshrl.u32 %v135, 7
    %v137 = vsub.s32 1, %v136
    %v138 = vrot.slane %v45, %v137
    %v141 = vmul.f32 %v114, %v134
    %v142 = vmul.f32 %v115, %v138
    %v143 = vmul.f32 %v116, %v134
    %v144 = vmul.f32 %v117, %v138
    %v145 = vmul.f32 %v118, %v134
    %v146 = vmul.f32 %v119, %v138
    %v147 = vmul.f32 %v120, %v134
    %v148 = vmul.f32 %v121, %v138
    %v149 = vmul.f32 %v122, %v134
    %v150 = vmul.f32 %v123, %v138
    %v151 = vmul.f32 %v124, %v134
    %v152 = vmul.f32 %v125, %v138
    %v153 = vmul.f32 %v126, %v134
    %v154 = vmul.f32 %v127, %v138
    %v155 = vmul.f32 %v128, %v134
    %v156 = vmul.f32 %v129, %v138
    %v157 = vadd.f32 %v141, %v142
    %v158 = vadd.f32 %v157, %v143
    %v159 = vadd.f32 %v158, %v144
    %v160 = vadd.f32 %v159, %v145
    %v161 = vadd.f32 %v160, %v146
    %v162 = vadd.f32 %v161, %v147
    %v163 = vadd.f32 %v162, %v148
    %v164 = vadd.f32 %v163, %v149
    %v165 = vadd.f32 %v164, %v150
    %v166 = vadd.f32 %v165, %v151
    %v167 = vadd.f32 %v166, %v152
    %v168 = vadd.f32 %v167, %v153
    %v169 = vadd.f32 %v168, %v154
    %v170 = vadd.f32 %v169, %v155
    %v171 = vadd.f32 %v170, %v156
    %172 = vadd.xlane.f32.xlu0 %v171
    %v173 = vpop.xlane.xlu0 %172
    %v174 = vrot.slane %v173, 4
    %v175 = vadd.f32 %v173, %v174
    %v176 = vrot.slane %v175, 2
    %v177 = vadd.f32 %v175, %v176
    %v178 = vrot.slane %v177, 1
    %v179 = vadd.f32 %v177, %v178
    %s180 = vtos %v179
    %181 = vrot.lane.b32.xlu0 %v29, 16
    %v182 = vpop.permute.xlu0 %181
    %183 = vrot.lane.b32.xlu0 %v31, 16
    %v184 = vpop.permute.xlu0 %183
    %185 = vrot.lane.b32.xlu0 %v33, 16
    %v186 = vpop.permute.xlu0 %185
    %187 = vrot.lane.b32.xlu0 %v35, 16
    %v188 = vpop.permute.xlu0 %187
    %189 = vrot.lane.b32.xlu0 %v37, 16
    %v190 = vpop.permute.xlu0 %189
    %191 = vrot.lane.b32.xlu0 %v39, 16
    %v192 = vpop.permute.xlu0 %191
    %193 = vrot.lane.b32.xlu0 %v41, 16
    %v194 = vpop.permute.xlu0 %193
    %195 = vrot.lane.b32.xlu0 %v43, 16
    %v196 = vpop.permute.xlu0 %195
    %197 = vrot.lane.b32.xlu0 %v30, 16
    %v198 = vpop.permute.xlu0 %197
    %199 = vrot.lane.b32.xlu0 %v32, 16
    %v200 = vpop.permute.xlu0 %199
    %201 = vrot.lane.b32.xlu0 %v34, 16
    %v202 = vpop.permute.xlu0 %201
    %203 = vrot.lane.b32.xlu0 %v36, 16
    %v204 = vpop.permute.xlu0 %203
    %205 = vrot.lane.b32.xlu0 %v38, 16
    %v206 = vpop.permute.xlu0 %205
    %207 = vrot.lane.b32.xlu0 %v40, 16
    %v208 = vpop.permute.xlu0 %207
    %209 = vrot.lane.b32.xlu0 %v42, 16
    %v210 = vpop.permute.xlu0 %209
    %211 = vrot.lane.b32.xlu0 %v44, 16
    %v212 = vpop.permute.xlu0 %211
    %vm213 = vcmp.lt.s32.totalorder %v80, 16
    %v214 = vsel %vm213, %v182, %v198
    %v215 = vsel %vm213, %v184, %v200
    %v216 = vsel %vm213, %v186, %v202
    %v217 = vsel %vm213, %v188, %v204
    %v218 = vsel %vm213, %v190, %v206
    %v219 = vsel %vm213, %v192, %v208
    %v220 = vsel %vm213, %v194, %v210
    %v221 = vsel %vm213, %v196, %v212
    %v222 = vsel %vm213, %v198, %v182
    %v223 = vsel %vm213, %v200, %v184
    %v224 = vsel %vm213, %v202, %v186
    %v225 = vsel %vm213, %v204, %v188
    %v226 = vsel %vm213, %v206, %v190
    %v227 = vsel %vm213, %v208, %v192
    %v228 = vsel %vm213, %v210, %v194
    %v229 = vsel %vm213, %v212, %v196
    %v230 = vsub.f32 %v29, %v222
    %v231 = vsub.f32 %v30, %v214
    %v232 = vsub.f32 %v31, %v223
    %v233 = vsub.f32 %v32, %v215
    %v234 = vsub.f32 %v33, %v224
    %v235 = vsub.f32 %v34, %v216
    %v236 = vsub.f32 %v35, %v225
    %v237 = vsub.f32 %v36, %v217
    %v238 = vsub.f32 %v37, %v226
    %v239 = vsub.f32 %v38, %v218
    %v240 = vsub.f32 %v39, %v227
    %v241 = vsub.f32 %v40, %v219
    %v242 = vsub.f32 %v41, %v228
    %v243 = vsub.f32 %v42, %v220
    %v244 = vsub.f32 %v43, %v229
    %v245 = vsub.f32 %v44, %v221
    %v246 = vand.u32 2147483647, %v230
    %v247 = vand.u32 2147483647, %v231
    %v248 = vand.u32 2147483647, %v232
    %v249 = vand.u32 2147483647, %v233
    %v250 = vand.u32 2147483647, %v234
    %v251 = vand.u32 2147483647, %v235
    %v252 = vand.u32 2147483647, %v236
    %v253 = vand.u32 2147483647, %v237
    %v254 = vand.u32 2147483647, %v238
    %v255 = vand.u32 2147483647, %v239
    %v256 = vand.u32 2147483647, %v240
    %v257 = vand.u32 2147483647, %v241
    %v258 = vand.u32 2147483647, %v242
    %v259 = vand.u32 2147483647, %v243
    %v260 = vand.u32 2147483647, %v244
    %v261 = vand.u32 2147483647, %v245
    %v263 = vlaneseq
    %v264 = vshrl.u32 %v263, 7
    %v265 = vsub.s32 0, %v264
    %v266 = vrot.slane %v46, %v265
    %v267 = vlaneseq
    %v268 = vshrl.u32 %v267, 7
    %v269 = vsub.s32 1, %v268
    %v270 = vrot.slane %v46, %v269
    %v273 = vmul.f32 %v246, %v266
    %v274 = vmul.f32 %v247, %v270
    %v275 = vmul.f32 %v248, %v266
    %v276 = vmul.f32 %v249, %v270
    %v277 = vmul.f32 %v250, %v266
    %v278 = vmul.f32 %v251, %v270
    %v279 = vmul.f32 %v252, %v266
    %v280 = vmul.f32 %v253, %v270
    %v281 = vmul.f32 %v254, %v266
    %v282 = vmul.f32 %v255, %v270
    %v283 = vmul.f32 %v256, %v266
    %v284 = vmul.f32 %v257, %v270
    %v285 = vmul.f32 %v258, %v266
    %v286 = vmul.f32 %v259, %v270
    %v287 = vmul.f32 %v260, %v266
    %v288 = vmul.f32 %v261, %v270
    %v289 = vadd.f32 %v273, %v274
    %v290 = vadd.f32 %v289, %v275
    %v291 = vadd.f32 %v290, %v276
    %v292 = vadd.f32 %v291, %v277
    %v293 = vadd.f32 %v292, %v278
    %v294 = vadd.f32 %v293, %v279
    %v295 = vadd.f32 %v294, %v280
    %v296 = vadd.f32 %v295, %v281
    %v297 = vadd.f32 %v296, %v282
    %v298 = vadd.f32 %v297, %v283
    %v299 = vadd.f32 %v298, %v284
    %v300 = vadd.f32 %v299, %v285
    %v301 = vadd.f32 %v300, %v286
    %v302 = vadd.f32 %v301, %v287
    %v303 = vadd.f32 %v302, %v288
    %304 = vadd.xlane.f32.xlu0 %v303
    %v305 = vpop.xlane.xlu0 %304
    %v306 = vrot.slane %v305, 4
    %v307 = vadd.f32 %v305, %v306
    %v308 = vrot.slane %v307, 2
    %v309 = vadd.f32 %v307, %v308
    %v310 = vrot.slane %v309, 1
    %v311 = vadd.f32 %v309, %v310
    %s312 = vtos %v311
    %v329 = vrot.slane %v29, 7
    %v330 = vrot.slane %v30, 7
    %v331 = vrot.slane %v31, 7
    %v332 = vrot.slane %v32, 7
    %v333 = vrot.slane %v33, 7
    %v334 = vrot.slane %v34, 7
    %v335 = vrot.slane %v35, 7
    %v336 = vrot.slane %v36, 7
    %v337 = vrot.slane %v37, 7
    %v338 = vrot.slane %v38, 7
    %v339 = vrot.slane %v39, 7
    %v340 = vrot.slane %v40, 7
    %v341 = vrot.slane %v41, 7
    %v342 = vrot.slane %v42, 7
    %v343 = vrot.slane %v43, 7
    %v344 = vrot.slane %v44, 7
    %v361 = vsub.f32 %v29, %v329
    %v362 = vsub.f32 %v30, %v330
    %v363 = vsub.f32 %v31, %v331
    %v364 = vsub.f32 %v32, %v332
    %v365 = vsub.f32 %v33, %v333
    %v366 = vsub.f32 %v34, %v334
    %v367 = vsub.f32 %v35, %v335
    %v368 = vsub.f32 %v36, %v336
    %v369 = vsub.f32 %v37, %v337
    %v370 = vsub.f32 %v38, %v338
    %v371 = vsub.f32 %v39, %v339
    %v372 = vsub.f32 %v40, %v340
    %v373 = vsub.f32 %v41, %v341
    %v374 = vsub.f32 %v42, %v342
    %v375 = vsub.f32 %v43, %v343
    %v376 = vsub.f32 %v44, %v344
    %v377 = vand.u32 2147483647, %v361
    %v378 = vand.u32 2147483647, %v362
    %v379 = vand.u32 2147483647, %v363
    %v380 = vand.u32 2147483647, %v364
    %v381 = vand.u32 2147483647, %v365
    %v382 = vand.u32 2147483647, %v366
    %v383 = vand.u32 2147483647, %v367
    %v384 = vand.u32 2147483647, %v368
    %v385 = vand.u32 2147483647, %v369
    %v386 = vand.u32 2147483647, %v370
    %v387 = vand.u32 2147483647, %v371
    %v388 = vand.u32 2147483647, %v372
    %v389 = vand.u32 2147483647, %v373
    %v390 = vand.u32 2147483647, %v374
    %v391 = vand.u32 2147483647, %v375
    %v392 = vand.u32 2147483647, %v376
    %v409 = vrot.slane %v377, 1
    %v410 = vrot.slane %v378, 1
    %v411 = vrot.slane %v379, 1
    %v412 = vrot.slane %v380, 1
    %v413 = vrot.slane %v381, 1
    %v414 = vrot.slane %v382, 1
    %v415 = vrot.slane %v383, 1
    %v416 = vrot.slane %v384, 1
    %v417 = vrot.slane %v385, 1
    %v418 = vrot.slane %v386, 1
    %v419 = vrot.slane %v387, 1
    %v420 = vrot.slane %v388, 1
    %v421 = vrot.slane %v389, 1
    %v422 = vrot.slane %v390, 1
    %v423 = vrot.slane %v391, 1
    %v424 = vrot.slane %v392, 1
    %vm441 = vcmask 1046528
    %v442 = vsel %vm441, %v409, 0.0
    %v443 = vsel %vm441, %v410, 0.0
    %v444 = vadd.f32 %v442, %v443
    %v445 = vsel %vm441, %v411, 0.0
    %v446 = vadd.f32 %v444, %v445
    %v447 = vsel %vm441, %v412, 0.0
    %v448 = vadd.f32 %v446, %v447
    %v449 = vsel %vm441, %v413, 0.0
    %v450 = vadd.f32 %v448, %v449
    %v451 = vsel %vm441, %v414, 0.0
    %v452 = vadd.f32 %v450, %v451
    %v453 = vsel %vm441, %v415, 0.0
    %v454 = vadd.f32 %v452, %v453
    %v455 = vsel %vm441, %v416, 0.0
    %v456 = vadd.f32 %v454, %v455
    %v457 = vsel %vm441, %v417, 0.0
    %v458 = vadd.f32 %v456, %v457
    %v459 = vsel %vm441, %v418, 0.0
    %v460 = vadd.f32 %v458, %v459
    %v461 = vsel %vm441, %v419, 0.0
    %v462 = vadd.f32 %v460, %v461
    %v463 = vsel %vm441, %v420, 0.0
    %v464 = vadd.f32 %v462, %v463
    %v465 = vsel %vm441, %v421, 0.0
    %v466 = vadd.f32 %v464, %v465
    %v467 = vsel %vm441, %v422, 0.0
    %v468 = vadd.f32 %v466, %v467
    %v469 = vsel %vm441, %v423, 0.0
    %v470 = vadd.f32 %v468, %v469
    %v471 = vsel %vm441, %v424, 0.0
    %v472 = vadd.f32 %v470, %v471
    %473 = vadd.xlane.f32.xlu0 %v472
    %v474 = vpop.xlane.xlu0 %473
    %v475 = vrot.slane %v474, 4
    %v476 = vadd.f32 %v474, %v475
    %v477 = vrot.slane %v476, 2
    %v478 = vadd.f32 %v476, %v477
    %v479 = vrot.slane %v478, 1
    %v480 = vadd.f32 %v478, %v479
    %s481 = vtos %v480
    %vm482 = vcmp.eq.s32.totalorder %v80, 0
    %v483 = vstv %s312
    %v484 = vsel %vm482, %v483, 0.0
    %vm485 = vcmp.eq.s32.totalorder %v80, 1
    %v486 = vstv %s481
    %v487 = vsel %vm485, %v486, 0.0
    %v488 = vadd.f32 %v484, %v487
    %vm489 = vcmp.eq.s32.totalorder %v80, 2
    %v490 = vstv %s180
    %v491 = vsel %vm489, %v490, 0.0
    %v492 = vadd.f32 %v488, %v491
    %493 = vst [vmem:[#allocation5] sm:$0x1] %v492
    // Predicated region
    $region18: #{tpu_custom_call.1} parent=1 // pred_check
      _
    $region19: #{tpu_custom_call.1} parent=1 // pred_check_branch
      %495 = sbr.rel (0) target = $region21
    $region20: #{tpu_custom_call.1} parent=1 // pred_region
      %s497 = ssub.s32 16, 16
      %498 = vsyncadd [#allocation4], %s497
      %s500 = sshll.u32 [#allocation5], 4
      %s501 = int_to_ptr.vmem [resolvable:$true] %s500
      %503 = dma.vmem_to_hbm [thread:$0]  %s501, 16, %s3, [#allocation4]
    $region21: #{tpu_custom_call.1} parent=1 // pred_fallthru
      _
    // Predicated region
    $region22: #{tpu_custom_call.1} parent=1 // pred_check
      _
    $region23: #{tpu_custom_call.1} parent=1 // pred_check_branch
      %505 = sbr.rel (0) target = $region25
    $region24: #{tpu_custom_call.1} parent=1 // pred_region
      %506 = dma.done [#allocation4], 16
    $region25: #{tpu_custom_call.1} parent=1 // pred_fallthru
      _
    %507 = vsyncpa [#allocation3], 1
    %508 = vsyncpa [#allocation4], 1

</llo_original>
